<compile_context>
chip_gen: v7x
topology: tpu7x:2x2x1
jax: 0.10.0
libtpu: 0.0.40
codegen_flags: <defaults>
</compile_context>

<pallas_src>
import jax
import jax.numpy as jnp
from jax import lax
from jax.experimental import pallas as pl
from jax.experimental.pallas import tpu as pltpu


def _sigmoid(x):
    # sigmoid via tanh identity: single EUP transcendental, no divide, stable.
    return 0.5 * (1.0 + jnp.tanh(0.5 * x))


# --------------------------------------------------------------------------
# Prologue: PersonNet + ItemNet (tiny MLPs, single block, runs once).
# --------------------------------------------------------------------------
def _prologue_kernel(
    xp_ref, xit_ref,
    pw1_ref, pb1_ref, pwl_ref, pbl_ref,          # PersonNet params ([in, out])
    iw1t_ref, ib1c_ref, iwabr_ref, ibabc_ref,    # ItemNet params (transposed layout)
    z_ref, ab_ref,
):
    # ---------------- PersonNet ----------------
    xp = xp_ref[...]                                                   # (Bp, N_items)
    h_p = _sigmoid(
        jnp.dot(xp, pw1_ref[...], preferred_element_type=jnp.float32) + pb1_ref[...]
    )                                                                  # (Bp, H)
    z = jnp.tanh(
        jnp.dot(h_p, pwl_ref[...], preferred_element_type=jnp.float32) + pbl_ref[...]
    ) * 3.0                                                            # (Bp, 1)
    # BatchNorm1d(1, eps=0, momentum=0, affine=False), training-mode semantics:
    # full-batch mean, *biased* variance, eps=0.  (var==0, e.g. Bp==1, yields
    # Inf/NaN -- same as the PyTorch reference with eps=0.)
    mean = jnp.mean(z)
    var = jnp.mean((z - mean) ** 2)
    z_ref[...] = (z - mean) * lax.rsqrt(var)

    # ---------------- ItemNet (transposed; fused a/b heads as rows) ----------------
    xit = xit_ref[...]                                                 # (N_users, Bi)
    h_it = _sigmoid(
        jnp.dot(iw1t_ref[...], xit, preferred_element_type=jnp.float32) + ib1c_ref[...]
    )                                                                  # (H, Bi)
    ab_raw = (jnp.dot(iwabr_ref[...], h_it, preferred_element_type=jnp.float32)
              + ibabc_ref[...])                                        # (2, Bi)
    row = lax.broadcasted_iota(jnp.int32, ab_raw.shape, 0)
    a_all = _sigmoid(ab_raw) * 3.0                                     # valid in row 0
    b_all = jnp.tanh(ab_raw) * 3.0                                     # valid in row 1
    ab_ref[...] = jnp.where(row == 0, a_all, b_all)                    # (2, Bi): [a ; b]


# --------------------------------------------------------------------------
# Tiled outer product: p[i, j] = sigmoid(a[j] * (z[i] - b[j]))
# --------------------------------------------------------------------------
def _outer_kernel(z_ref, ab_ref, out_ref):
    z = z_ref[...]                 # (TM, 1)
    ab = ab_ref[...]               # (2, TN)  row 0 = a, row 1 = b
    # sigmoid(a*(z-b)) = 0.5 + 0.5*tanh((0.5*a)*z - (0.5*a)*b)
    ah = 0.5 * ab[0:1, :]          # (1, TN)  per-column constant
    c = ah * ab[1:2, :]            # (1, TN)  per-column constant
    t = z * ah - c                 # (TM, TN) broadcasted outer product
    out_ref[...] = (0.5 * jnp.tanh(t) + 0.5).astype(out_ref.dtype)


# --------------------------------------------------------------------------
# Wrapper
# --------------------------------------------------------------------------
def cen_qb_forward(x_person, x_item, params, *, out_dtype=jnp.float32,
                   tm=None, tn=None):
    Bp = x_person.shape[0]
    Bi = x_item.shape[0]

    # TODO(synk): for very large Bp/Bi (hundreds of thousands of rows) the
    # whole-array-in-VMEM prologue should be tiled over the batch (running
    # sum/sumsq accumulators for the BatchNorm); current sizes fit easily.

    # ItemNet re-laid out transposed: weights as rows, inputs as columns, so
    # the prologue emits a lane-dense (2, Bi) [a ; b] slab directly.
    xi_t = x_item.T                                                    # (N_users, Bi)
    iw1_t = params["iw1"].T                                            # (H, N_users)
    ib1_c = params["ib1"].T                                            # (H, 1)
    iwab_r = jnp.concatenate([params["iwa"].T, params["iwb"].T], axis=0)   # (2, H)
    ibab_c = jnp.concatenate([params["iba"], params["ibb"]], axis=0)       # (2, 1)

    vmem = pl.BlockSpec(memory_space=pltpu.MemorySpace.VMEM)
    z, ab = pl.pallas_call(
        _prologue_kernel,
        out_shape=(jax.ShapeDtypeStruct((Bp, 1), jnp.float32),
                   jax.ShapeDtypeStruct((2, Bi), jnp.float32)),
        in_specs=[vmem] * 10,
        out_specs=(vmem, vmem),
    )(x_person, xi_t,
      params["pw1"], params["pb1"], params["pwl"], params["pbl"],
      iw1_t, ib1_c, iwab_r, ibab_c)

    # Tile selection: either a multiple of (8, 128) or the full array extent
    # (both satisfy the Mosaic block-shape constraint).  512 x 2048 f32 is a
    # 4 MiB tile (~8 MiB double-buffered output), comfortably inside the
    # 32 MiB scoped VMEM budget on v5e/v6e/v7x while amortizing per-step
    # overhead on the HBM-write-bound loop.
    TM = tm if tm is not None else (512 if Bp >= 512 else Bp)
    TN = tn if tn is not None else (2048 if Bi >= 2048 else Bi)

    # Exact output shape; ragged edge tiles handled by OOB write masking
    # (no pad + slice copy of the full Bp x Bi output).
    grid = (pl.cdiv(Bp, TM), pl.cdiv(Bi, TN))
    out = pl.pallas_call(
        _outer_kernel,
        out_shape=jax.ShapeDtypeStruct((Bp, Bi), out_dtype),
        grid=grid,
        in_specs=[
            # z block index is constant along the inner (j) axis -> not re-DMAed.
            pl.BlockSpec((TM, 1), lambda i, j: (i, 0)),
            pl.BlockSpec((2, TN), lambda i, j: (0, j)),
        ],
        out_specs=pl.BlockSpec((TM, TN), lambda i, j: (i, j)),
        compiler_params=pltpu.CompilerParams(
            dimension_semantics=("parallel", "parallel"),
            vmem_limit_bytes=32 * 1024 * 1024,
        ),
    )(z, ab)
    return out


# --------------------------------------------------------------------------
# Pure-JAX reference (exact formulation of the PyTorch forward, depth=1).
# --------------------------------------------------------------------------
def cen_qb_reference(x_person, x_item, params):
    h_p = jax.nn.sigmoid(x_person @ params["pw1"] + params["pb1"])
    z = jnp.tanh(h_p @ params["pwl"] + params["pbl"]) * 3.0
    mean = jnp.mean(z)
    var = jnp.mean((z - mean) ** 2)
    z = (z - mean) / jnp.sqrt(var)
    h_i = jax.nn.sigmoid(x_item @ params["iw1"] + params["ib1"])
    a = jax.nn.sigmoid(h_i @ params["iwa"] + params["iba"]) * 3.0
    b = jnp.tanh(h_i @ params["iwb"] + params["ibb"]) * 3.0
    a = a.reshape(1, -1)
    b = b.reshape(1, -1)
    return 1.0 / (1.0 + jnp.exp(-a * (z - b)))


def init_params(key, n_items, n_users, hidden):
    """Deterministic synthetic parameters. Weights stored as [in, out]."""
    ks = jax.random.split(key, 10)

    def w(k, shape, fan_in):
        return (jax.random.uniform(k, shape, jnp.float32, -1.0, 1.0)
                / jnp.sqrt(jnp.float32(fan_in)))

    return {
        # PersonNet
        "pw1": w(ks[0], (n_items, hidden), n_items),
        "pb1": w(ks[1], (1, hidden), n_items),
        "pwl": w(ks[2], (hidden, 1), hidden),
        "pbl": w(ks[3], (1, 1), hidden),
        # ItemNet
        "iw1": w(ks[4], (n_users, hidden), n_users),
        "ib1": w(ks[5], (1, hidden), n_users),
        "iwa": w(ks[6], (hidden, 1), hidden),
        "iba": w(ks[7], (1, 1), hidden),
        "iwb": w(ks[8], (hidden, 1), hidden),
        "ibb": w(ks[9], (1, 1), hidden),
    }


if __name__ == "__main__":
    # depth=1 (no extra hidden layers), small shapes.
    N_ITEMS = 16           # inp_size_person_net
    N_USERS = 16           # inp_size_item_net
    HIDDEN = 32

    key = jax.random.PRNGKey(0)
    k_xp, k_xi, k_par = jax.random.split(key, 3)
    params = init_params(k_par, N_ITEMS, N_USERS, HIDDEN)

    # Case 1: tiny square batches (single-tile path).
    Bp, Bi = 8, 8
    x_person = jax.random.normal(k_xp, (Bp, N_ITEMS), jnp.float32)
    x_item = jax.random.normal(k_xi, (Bi, N_USERS), jnp.float32)
    p = jax.block_until_ready(cen_qb_forward(x_person, x_item, params))
    p_ref = cen_qb_reference(x_person, x_item, params)
    assert p.shape == (Bp, Bi)
    assert jnp.allclose(p, p_ref, atol=1e-5, rtol=1e-5), "mismatch vs JAX reference (8x8)"

    # Case 2: non-tile-aligned batches, single block equal to the full dims.
    Bp2, Bi2 = 24, 40
    x_person2 = jax.random.normal(jax.random.PRNGKey(1), (Bp2, N_ITEMS), jnp.float32)
    x_item2 = jax.random.normal(jax.random.PRNGKey(2), (Bi2, N_USERS), jnp.float32)
    p2 = jax.block_until_ready(cen_qb_forward(x_person2, x_item2, params))
    p2_ref = cen_qb_reference(x_person2, x_item2, params)
    assert p2.shape == (Bp2, Bi2)
    assert jnp.allclose(p2, p2_ref, atol=1e-5, rtol=1e-5), "mismatch vs JAX reference (24x40)"

    # Case 3: force small tiles to exercise the ragged multi-tile grid path
    # (OOB write masking on both edge axes, z reuse along the inner axis).
    Bp3, Bi3 = 24, 200
    x_person3 = jax.random.normal(jax.random.PRNGKey(3), (Bp3, N_ITEMS), jnp.float32)
    x_item3 = jax.random.normal(jax.random.PRNGKey(4), (Bi3, N_USERS), jnp.float32)
    p3 = jax.block_until_ready(
        cen_qb_forward(x_person3, x_item3, params, tm=16, tn=128))
    p3_ref = cen_qb_reference(x_person3, x_item3, params)
    assert p3.shape == (Bp3, Bi3)
    assert jnp.allclose(p3, p3_ref, atol=1e-5, rtol=1e-5), "mismatch vs JAX reference (24x200 ragged)"

    print("KERNEL_OK")
</pallas_src>

<mosaic_0001>
module attributes {stable_mosaic.version = 11 : i64} {
  func.func @_prologue_kernel(%arg0: memref<8x16xf32, #tpu.memory_space<vmem>>, %arg1: memref<16x8xf32, #tpu.memory_space<vmem>>, %arg2: memref<16x32xf32, #tpu.memory_space<vmem>>, %arg3: memref<1x32xf32, #tpu.memory_space<vmem>>, %arg4: memref<32x1xf32, #tpu.memory_space<vmem>>, %arg5: memref<1x1xf32, #tpu.memory_space<vmem>>, %arg6: memref<32x16xf32, #tpu.memory_space<vmem>>, %arg7: memref<32x1xf32, #tpu.memory_space<vmem>>, %arg8: memref<2x32xf32, #tpu.memory_space<vmem>>, %arg9: memref<2x1xf32, #tpu.memory_space<vmem>>, %arg10: memref<8x1xf32, #tpu.memory_space<vmem>>, %arg11: memref<2x8xf32, #tpu.memory_space<vmem>>) attributes {dimension_semantics = [], scalar_prefetch = 0 : i64, scratch_operands = 0 : i64, tpu.core_type = #tpu.core_type<tc>} {
    %c0 = arith.constant 0 : index
    %c0_0 = arith.constant 0 : index
    %0 = vector.load %arg0[%c0, %c0_0] : memref<8x16xf32, #tpu.memory_space<vmem>>, vector<8x16xf32>
    %c0_1 = arith.constant 0 : index
    %c0_2 = arith.constant 0 : index
    %1 = vector.load %arg2[%c0_1, %c0_2] : memref<16x32xf32, #tpu.memory_space<vmem>>, vector<16x32xf32>
    %cst = arith.constant dense<0.000000e+00> : vector<8x32xf32>
    %2 = tpu.matmul %0, %1, %cst {dimension_numbers = #tpu.dot_dimension_numbers<[1], [0], [0], [1], [0, 0, 1, 1], [], []>} : vector<8x16xf32>, vector<16x32xf32>, vector<8x32xf32> -> vector<8x32xf32>
    %c0_3 = arith.constant 0 : index
    %c0_4 = arith.constant 0 : index
    %3 = vector.load %arg3[%c0_3, %c0_4] : memref<1x32xf32, #tpu.memory_space<vmem>>, vector<1x32xf32>
    %4 = vector.broadcast %3 : vector<1x32xf32> to vector<8x32xf32>
    %5 = arith.addf %2, %4 : vector<8x32xf32>
    %cst_5 = arith.constant 5.000000e-01 : f32
    %6 = vector.broadcast %cst_5 : f32 to vector<8x32xf32>
    %7 = arith.mulf %6, %5 : vector<8x32xf32>
    %8 = math.tanh %7 : vector<8x32xf32>
    %cst_6 = arith.constant 1.000000e+00 : f32
    %9 = vector.broadcast %cst_6 : f32 to vector<8x32xf32>
    %10 = arith.addf %9, %8 : vector<8x32xf32>
    %cst_7 = arith.constant 5.000000e-01 : f32
    %11 = vector.broadcast %cst_7 : f32 to vector<8x32xf32>
    %12 = arith.mulf %11, %10 : vector<8x32xf32>
    %c0_8 = arith.constant 0 : index
    %c0_9 = arith.constant 0 : index
    %13 = vector.load %arg4[%c0_8, %c0_9] : memref<32x1xf32, #tpu.memory_space<vmem>>, vector<32x1xf32>
    %cst_10 = arith.constant dense<0.000000e+00> : vector<8x1xf32>
    %14 = tpu.matmul %12, %13, %cst_10 {dimension_numbers = #tpu.dot_dimension_numbers<[1], [0], [0], [1], [0, 0, 1, 1], [], []>} : vector<8x32xf32>, vector<32x1xf32>, vector<8x1xf32> -> vector<8x1xf32>
    %c0_11 = arith.constant 0 : index
    %c0_12 = arith.constant 0 : index
    %15 = vector.load %arg5[%c0_11, %c0_12] : memref<1x1xf32, #tpu.memory_space<vmem>>, vector<1x1xf32>
    %16 = vector.broadcast %15 : vector<1x1xf32> to vector<8x1xf32>
    %17 = arith.addf %14, %16 : vector<8x1xf32>
    %18 = math.tanh %17 : vector<8x1xf32>
    %cst_13 = arith.constant 3.000000e+00 : f32
    %19 = vector.broadcast %cst_13 : f32 to vector<8x1xf32>
    %20 = arith.mulf %18, %19 : vector<8x1xf32>
    %21 = vector.shape_cast %20 : vector<8x1xf32> to vector<1x8x1xf32>
    %cst_14 = arith.constant dense<0.000000e+00> : vector<1xf32>
    %22 = vector.multi_reduction <add>, %21, %cst_14 [1, 2] : vector<1x8x1xf32> to vector<1xf32>
    %23 = vector.shape_cast %22 : vector<1xf32> to vector<1x1x1xf32>
    %24 = vector.extract %23[0, 0, 0] : f32 from vector<1x1x1xf32>
    %cst_15 = arith.constant 8.000000e+00 : f32
    %25 = arith.divf %24, %cst_15 : f32
    %26 = vector.broadcast %25 : f32 to vector<8x1xf32>
    %27 = arith.subf %20, %26 : vector<8x1xf32>
    %28 = arith.mulf %27, %27 : vector<8x1xf32>
    %29 = vector.shape_cast %28 : vector<8x1xf32> to vector<1x8x1xf32>
    %cst_16 = arith.constant dense<0.000000e+00> : vector<1xf32>
    %30 = vector.multi_reduction <add>, %29, %cst_16 [1, 2] : vector<1x8x1xf32> to vector<1xf32>
    %31 = vector.shape_cast %30 : vector<1xf32> to vector<1x1x1xf32>
    %32 = vector.extract %31[0, 0, 0] : f32 from vector<1x1x1xf32>
    %cst_17 = arith.constant 8.000000e+00 : f32
    %33 = arith.divf %32, %cst_17 : f32
    %34 = vector.broadcast %25 : f32 to vector<8x1xf32>
    %35 = arith.subf %20, %34 : vector<8x1xf32>
    %36 = math.rsqrt %33 : f32
    %37 = vector.broadcast %36 : f32 to vector<8x1xf32>
    %38 = arith.mulf %35, %37 : vector<8x1xf32>
    %c0_18 = arith.constant 0 : index
    %c0_19 = arith.constant 0 : index
    %39 = vector.load %arg10[%c0_18, %c0_19] : memref<8x1xf32, #tpu.memory_space<vmem>>, vector<8x1xf32>
    tpu.vector_store %arg10[%c0_18, %c0_19], %38 {strides = array<i32>} : memref<8x1xf32, #tpu.memory_space<vmem>>, vector<8x1xf32>,
    %c0_20 = arith.constant 0 : index
    %c0_21 = arith.constant 0 : index
    %40 = vector.load %arg1[%c0_20, %c0_21] : memref<16x8xf32, #tpu.memory_space<vmem>>, vector<16x8xf32>
    %c0_22 = arith.constant 0 : index
    %c0_23 = arith.constant 0 : index
    %41 = vector.load %arg6[%c0_22, %c0_23] : memref<32x16xf32, #tpu.memory_space<vmem>>, vector<32x16xf32>
    %cst_24 = arith.constant dense<0.000000e+00> : vector<32x8xf32>
    %42 = tpu.matmul %41, %40, %cst_24 {dimension_numbers = #tpu.dot_dimension_numbers<[1], [0], [0], [1], [0, 0, 1, 1], [], []>} : vector<32x16xf32>, vector<16x8xf32>, vector<32x8xf32> -> vector<32x8xf32>
    %c0_25 = arith.constant 0 : index
    %c0_26 = arith.constant 0 : index
    %43 = vector.load %arg7[%c0_25, %c0_26] : memref<32x1xf32, #tpu.memory_space<vmem>>, vector<32x1xf32>
    %44 = vector.broadcast %43 : vector<32x1xf32> to vector<32x8xf32>
    %45 = arith.addf %42, %44 : vector<32x8xf32>
    %cst_27 = arith.constant 5.000000e-01 : f32
    %46 = vector.broadcast %cst_27 : f32 to vector<32x8xf32>
    %47 = arith.mulf %46, %45 : vector<32x8xf32>
    %48 = math.tanh %47 : vector<32x8xf32>
    %cst_28 = arith.constant 1.000000e+00 : f32
    %49 = vector.broadcast %cst_28 : f32 to vector<32x8xf32>
    %50 = arith.addf %49, %48 : vector<32x8xf32>
    %cst_29 = arith.constant 5.000000e-01 : f32
    %51 = vector.broadcast %cst_29 : f32 to vector<32x8xf32>
    %52 = arith.mulf %51, %50 : vector<32x8xf32>
    %c0_30 = arith.constant 0 : index
    %c0_31 = arith.constant 0 : index
    %53 = vector.load %arg8[%c0_30, %c0_31] : memref<2x32xf32, #tpu.memory_space<vmem>>, vector<2x32xf32>
    %cst_32 = arith.constant dense<0.000000e+00> : vector<2x8xf32>
    %54 = tpu.matmul %53, %52, %cst_32 {dimension_numbers = #tpu.dot_dimension_numbers<[1], [0], [0], [1], [0, 0, 1, 1], [], []>} : vector<2x32xf32>, vector<32x8xf32>, vector<2x8xf32> -> vector<2x8xf32>
    %c0_33 = arith.constant 0 : index
    %c0_34 = arith.constant 0 : index
    %55 = vector.load %arg9[%c0_33, %c0_34] : memref<2x1xf32, #tpu.memory_space<vmem>>, vector<2x1xf32>
    %56 = vector.broadcast %55 : vector<2x1xf32> to vector<2x8xf32>
    %57 = arith.addf %54, %56 : vector<2x8xf32>
    %58 = tpu.iota {dimensions = array<i32: 0>} : vector<2x8xi32>
    %cst_35 = arith.constant 5.000000e-01 : f32
    %59 = vector.broadcast %cst_35 : f32 to vector<2x8xf32>
    %60 = arith.mulf %59, %57 : vector<2x8xf32>
    %61 = math.tanh %60 : vector<2x8xf32>
    %cst_36 = arith.constant 1.000000e+00 : f32
    %62 = vector.broadcast %cst_36 : f32 to vector<2x8xf32>
    %63 = arith.addf %62, %61 : vector<2x8xf32>
    %cst_37 = arith.constant 5.000000e-01 : f32
    %64 = vector.broadcast %cst_37 : f32 to vector<2x8xf32>
    %65 = arith.mulf %64, %63 : vector<2x8xf32>
    %cst_38 = arith.constant 3.000000e+00 : f32
    %66 = vector.broadcast %cst_38 : f32 to vector<2x8xf32>
    %67 = arith.mulf %65, %66 : vector<2x8xf32>
    %68 = math.tanh %57 : vector<2x8xf32>
    %cst_39 = arith.constant 3.000000e+00 : f32
    %69 = vector.broadcast %cst_39 : f32 to vector<2x8xf32>
    %70 = arith.mulf %68, %69 : vector<2x8xf32>
    %c0_i32 = arith.constant 0 : i32
    %71 = vector.broadcast %c0_i32 : i32 to vector<2x8xi32>
    %72 = arith.cmpi eq, %58, %71 : vector<2x8xi32>
    %73 = arith.select %72, %67, %70 : vector<2x8xi1>, vector<2x8xf32>
    %c0_40 = arith.constant 0 : index
    %c0_41 = arith.constant 0 : index
    %74 = vector.load %arg11[%c0_40, %c0_41] : memref<2x8xf32, #tpu.memory_space<vmem>>, vector<2x8xf32>
    tpu.vector_store %arg11[%c0_40, %c0_41], %73 {strides = array<i32>} : memref<2x8xf32, #tpu.memory_space<vmem>>, vector<2x8xf32>,
    return
  }
}

</mosaic_0001>

<llo_original>
// kernel: tpu_custom_call.1
$region0: #{tpu_custom_call.1}
  #allocation0 [shape = 'u32[]', space=smem, size = 0x4, offset = 0x4, fixed_abs, tag = 'smem constant byte address 0x4 - core index']
  #allocation1 [shape = 'u32[144,128]{1,0:T(1,128)}', space=vmem, size = 0x12000, scoped, tag = 'internal scratch']
  #allocation2 [shape = 'f32[1,1]{1,0:T(1,128)S(1)}', space=vmem, size = 0x200, scoped, tag = 'scoped memory for tpu_custom_call.1']
  %s0 = inlined_call_operand.vmem [shape: f32[8,16], index: 0, kind: input, shape index: {}]
  %s1 = inlined_call_operand.vmem [shape: f32[16,8], index: 1, kind: input, shape index: {}]
  %s2 = inlined_call_operand.vmem [shape: f32[16,32], index: 2, kind: input, shape index: {}]
  %s3 = inlined_call_operand.vmem [shape: f32[1,32], index: 3, kind: input, shape index: {}]
  %s4 = inlined_call_operand.vmem [shape: f32[32,1], index: 4, kind: input, shape index: {}]
  %s5 = inlined_call_operand.<no memory space> [shape: f32[1,1], index: 5, kind: input, shape index: {}]
  %s6 = inlined_call_operand.vmem [shape: f32[32,16], index: 6, kind: input, shape index: {}]
  %s7 = inlined_call_operand.vmem [shape: f32[32,1], index: 7, kind: input, shape index: {}]
  %s8 = inlined_call_operand.vmem [shape: f32[2,32], index: 8, kind: input, shape index: {}]
  %s9 = inlined_call_operand.vmem [shape: f32[2,1], index: 9, kind: input, shape index: {}]
  %s10 = inlined_call_operand.vmem [shape: f32[8,1], index: 10, kind: output, shape index: {0}]
  %s11 = inlined_call_operand.hbm [shape: f32[2,8], index: 11, kind: output, shape index: {1}]
  %12 = xla_tuple %s10, %s11
  %s13 = sld [smem:[#allocation0]]
  $region58: #{tpu_custom_call.1} parent=0
    _
  %s15 = ssub.s32 1, %s13
  %s16 = scalar_select 0, %s15, %s13
  %v17 = vstv %s5
  %18 = vst [vmem:[#allocation2] sm:$0x1] %v17
  $region1: #{tpu_custom_call.1} parent=0
    #allocation3 [shape = 'u8[1024]{0}', space=vmem, size = 0x400, scoped, tag = 'output window, operand 1, single buffered']
    #allocation4 [shape = 's32[1]{0}', space=sflag, size = 0x4, scoped, tag = 'scoped memory for tpu_custom_call.1']
    %19 = vsyncpa [#allocation4], 0
    // Predicated region
    $region2: #{tpu_custom_call.1} parent=1 // pred_check
      _
    $region3: #{tpu_custom_call.1} parent=1 // pred_check_branch
      %21 = sbr.rel (0) target = $region5
    $region4: #{tpu_custom_call.1} parent=1 // pred_region
      _
    $region5: #{tpu_custom_call.1} parent=1 // pred_fallthru
      _
    // Predicated region
    $region6: #{tpu_custom_call.1} parent=1 // pred_check
      _
    $region7: #{tpu_custom_call.1} parent=1 // pred_check_branch
      %23 = sbr.rel (0) target = $region9
    $region8: #{tpu_custom_call.1} parent=1 // pred_region
      _
    $region9: #{tpu_custom_call.1} parent=1 // pred_fallthru
      _
    // Predicated region
    $region10: #{tpu_custom_call.1} parent=1 // pred_check
      _
    $region11: #{tpu_custom_call.1} parent=1 // pred_check_branch
      %25 = sbr.rel (0) target = $region13
    $region12: #{tpu_custom_call.1} parent=1 // pred_region
      _
    $region13: #{tpu_custom_call.1} parent=1 // pred_fallthru
      _
    // Predicated region
    $region14: #{tpu_custom_call.1} parent=1 // pred_check
      _
    $region15: #{tpu_custom_call.1} parent=1 // pred_check_branch
      %27 = sbr.rel (0) target = $region17
    $region16: #{tpu_custom_call.1} parent=1 // pred_region
      _
    $region17: #{tpu_custom_call.1} parent=1 // pred_fallthru
      _
    // Predicated region
    $region18: #{tpu_custom_call.1} parent=1 // pred_check
      _
    $region19: #{tpu_custom_call.1} parent=1 // pred_check_branch
      %29 = sbr.rel (0) target = $region21
    $region20: #{tpu_custom_call.1} parent=1 // pred_region
      _
    $region21: #{tpu_custom_call.1} parent=1 // pred_fallthru
      _
    // Predicated region
    $region22: #{tpu_custom_call.1} parent=1 // pred_check
      _
    $region23: #{tpu_custom_call.1} parent=1 // pred_check_branch
      %31 = sbr.rel (0) target = $region25
    $region24: #{tpu_custom_call.1} parent=1 // pred_region
      _
    $region25: #{tpu_custom_call.1} parent=1 // pred_fallthru
      _
    // Predicated region
    $region26: #{tpu_custom_call.1} parent=1 // pred_check
      _
    $region27: #{tpu_custom_call.1} parent=1 // pred_check_branch
      %33 = sbr.rel (0) target = $region29
    $region28: #{tpu_custom_call.1} parent=1 // pred_region
      _
    $region29: #{tpu_custom_call.1} parent=1 // pred_fallthru
      _
    // Predicated region
    $region30: #{tpu_custom_call.1} parent=1 // pred_check
      _
    $region31: #{tpu_custom_call.1} parent=1 // pred_check_branch
      %35 = sbr.rel (0) target = $region33
    $region32: #{tpu_custom_call.1} parent=1 // pred_region
      _
    $region33: #{tpu_custom_call.1} parent=1 // pred_fallthru
      _
    // Predicated region
    $region34: #{tpu_custom_call.1} parent=1 // pred_check
      _
    $region35: #{tpu_custom_call.1} parent=1 // pred_check_branch
      %37 = sbr.rel (0) target = $region37
    $region36: #{tpu_custom_call.1} parent=1 // pred_region
      _
    $region37: #{tpu_custom_call.1} parent=1 // pred_fallthru
      _
    // Predicated region
    $region38: #{tpu_custom_call.1} parent=1 // pred_check
      _
    $region39: #{tpu_custom_call.1} parent=1 // pred_check_branch
      %39 = sbr.rel (0) target = $region41
    $region40: #{tpu_custom_call.1} parent=1 // pred_region
      _
    $region41: #{tpu_custom_call.1} parent=1 // pred_fallthru
      _
    %v40 = vld [vmem:[%s0] sm:$0xff]
    %v41 = vld [vmem:[%s2] sm:$0xff]
    %v42 = vld [vmem:[%s2 + $0x8] sm:$0xff]
    %v43 = vld [vmem:[%s3] sm:$0x1]
    %v45 = vlaneseq
    %v46 = vshrl.u32 %v45, 7
    %v47 = vsub.s32 0, %v46
    %v48 = vrot.slane %v43, %v47
    %vm50 = vcmask 130048
    %v52 = vsel %vm50, %v40, 0
    %54 = vmatprep.subr.mxu0 0.0
    %55 = vmatpush1.msra.mxu0 %v41
    %56 = vmatprep.subr.mxu0 0.0
    %57 = vmatpush1.msra.mxu0 %v42
    %58 = vmatprep.subr.mxu0 0.0
    %59 = vmatpush1.msra.mxu0 0.0
    %60 = vmatprep.subr.mxu0 0.0
    %61 = vmatpush1.msra.mxu0 0.0
    %62 = vmatprep.subr.mxu0 0.0
    %63 = vmatpush1.msra.mxu0 0.0
    %64 = vmatprep.subr.mxu0 0.0
    %65 = vmatpush1.msra.mxu0 0.0
    %66 = vmatprep.subr.mxu0 0.0
    %67 = vmatpush1.msra.mxu0 0.0
    %68 = vmatprep.subr.mxu0 0.0
    %69 = vmatpush1.msra.mxu0 0.0
    %70 = vmatprep.subr.mxu0 0.0
    %71 = vmatpush1.msra.mxu0 0.0
    %72 = vmatprep.subr.mxu0 0.0
    %73 = vmatpush1.msra.mxu0 0.0
    %74 = vmatprep.subr.mxu0 0.0
    %75 = vmatpush1.msra.mxu0 0.0
    %76 = vmatprep.subr.mxu0 0.0
    %77 = vmatpush1.msra.mxu0 0.0
    %78 = vmatprep.subr.mxu0 0.0
    %79 = vmatpush1.msra.mxu0 0.0
    %80 = vmatprep.subr.mxu0 0.0
    %81 = vmatpush1.msra.mxu0 0.0
    %82 = vmatprep.subr.mxu0 0.0
    %83 = vmatpush1.msra.mxu0 0.0
    %84 = vmatprep.subr.mxu0 0.0
    %85 = vmatpush1.msra.mxu0 0.0
    %86 = vmatprep.subr.mxu0 0.0
    %87 = vmatpush1.msra.mxu0 0.0
    %88 = vmatprep.subr.mxu0 0.0
    %89 = vmatpush1.msra.mxu0 0.0
    %90 = vmatprep.subr.mxu0 0.0
    %91 = vmatpush1.msra.mxu0 0.0
    %92 = vmatprep.subr.mxu0 0.0
    %93 = vmatpush1.msra.mxu0 0.0
    %94 = vmatprep.subr.mxu0 0.0
    %95 = vmatpush1.msra.mxu0 0.0
    %96 = vmatprep.subr.mxu0 0.0
    %97 = vmatpush1.msra.mxu0 0.0
    %98 = vmatprep.subr.mxu0 0.0
    %99 = vmatpush1.msra.mxu0 0.0
    %100 = vmatprep.subr.mxu0 0.0
    %101 = vmatpush1.msra.mxu0 0.0
    %102 = vmatprep.subr.mxu0 0.0
    %103 = vmatpush1.msra.mxu0 0.0
    %104 = vmatprep.subr.mxu0 0.0
    %105 = vmatpush1.msra.mxu0 0.0
    %106 = vmatprep.subr.mxu0 0.0
    %107 = vmatpush1.msra.mxu0 0.0
    %108 = vmatprep.subr.mxu0 0.0
    %109 = vmatpush1.msra.mxu0 0.0
    %110 = vmatprep.subr.mxu0 0.0
    %111 = vmatpush1.msra.mxu0 0.0
    %112 = vmatprep.subr.mxu0 0.0
    %113 = vmatpush1.msra.mxu0 0.0
    %114 = vmatprep.subr.mxu0 0.0
    %115 = vmatpush1.msra.mxu0 0.0
    %116 = vmatprep.subr.mxu0 0.0
    %117 = vmatpush1.msra.mxu0 0.0
    %118 = vmatprep.mubr.f32.mxu0 0.0
    %119 = vmatmul.mubr.f32.gmra.mrb[0].mxu0 %v52
    %v120 = vpop.f32.mrb[0].mxu0
    %v121 = vadd.f32 %v48, %v120
    %v122 = vpop.f32.mrb[0].mxu0
    %123 = vdwg.mxu0
    %v124 = vmul.f32 %v121, 0.5
    %v125 = vtanh.pop %v124
    %v126 = vadd.f32 %v125, 1.0
    %v127 = vmul.f32 %v126, 0.5
    %v128 = vld [vmem:[%s4] sm:$0xff]
    %v129 = vld [vmem:[%s4 + $0x8] sm:$0xff]
    %v130 = vld [vmem:[%s4 + $0x10] sm:$0xff]
    %v131 = vld [vmem:[%s4 + $0x18] sm:$0xff]
    %v132 = vld [vmem:[#allocation2] sm:$0x1]
    %v134 = vlaneseq
    %v135 = vshrl.u32 %v134, 7
    %v136 = vsub.s32 0, %v135
    %v137 = vrot.slane %v132, %v136
    %vm139 = vcmask 261120
    %v141 = vsel %vm139, %v127, 0
    %143 = vmatprep.subr.mxu0 0.0
    %144 = vmatpush1.msra.mxu0 %v128
    %145 = vmatprep.subr.mxu0 0.0
    %146 = vmatpush1.msra.mxu0 %v129
    %147 = vmatprep.subr.mxu0 0.0
    %148 = vmatpush1.msra.mxu0 %v130
    %149 = vmatprep.subr.mxu0 0.0
    %150 = vmatpush1.msra.mxu0 %v131
    %151 = vmatprep.subr.mxu0 0.0
    %152 = vmatpush1.msra.mxu0 0.0
    %153 = vmatprep.subr.mxu0 0.0
    %154 = vmatpush1.msra.mxu0 0.0
    %155 = vmatprep.subr.mxu0 0.0
    %156 = vmatpush1.msra.mxu0 0.0
    %157 = vmatprep.subr.mxu0 0.0
    %158 = vmatpush1.msra.mxu0 0.0
    %159 = vmatprep.subr.mxu0 0.0
    %160 = vmatpush1.msra.mxu0 0.0
    %161 = vmatprep.subr.mxu0 0.0
    %162 = vmatpush1.msra.mxu0 0.0
    %163 = vmatprep.subr.mxu0 0.0
    %164 = vmatpush1.msra.mxu0 0.0
    %165 = vmatprep.subr.mxu0 0.0
    %166 = vmatpush1.msra.mxu0 0.0
    %167 = vmatprep.subr.mxu0 0.0
    %168 = vmatpush1.msra.mxu0 0.0
    %169 = vmatprep.subr.mxu0 0.0
    %170 = vmatpush1.msra.mxu0 0.0
    %171 = vmatprep.subr.mxu0 0.0
    %172 = vmatpush1.msra.mxu0 0.0
    %173 = vmatprep.subr.mxu0 0.0
    %174 = vmatpush1.msra.mxu0 0.0
    %175 = vmatprep.subr.mxu0 0.0
    %176 = vmatpush1.msra.mxu0 0.0
    %177 = vmatprep.subr.mxu0 0.0
    %178 = vmatpush1.msra.mxu0 0.0
    %179 = vmatprep.subr.mxu0 0.0
    %180 = vmatpush1.msra.mxu0 0.0
    %181 = vmatprep.subr.mxu0 0.0
    %182 = vmatpush1.msra.mxu0 0.0
    %183 = vmatprep.subr.mxu0 0.0
    %184 = vmatpush1.msra.mxu0 0.0
    %185 = vmatprep.subr.mxu0 0.0
    %186 = vmatpush1.msra.mxu0 0.0
    %187 = vmatprep.subr.mxu0 0.0
    %188 = vmatpush1.msra.mxu0 0.0
    %189 = vmatprep.subr.mxu0 0.0
    %190 = vmatpush1.msra.mxu0 0.0
    %191 = vmatprep.subr.mxu0 0.0
    %192 = vmatpush1.msra.mxu0 0.0
    %193 = vmatprep.subr.mxu0 0.0
    %194 = vmatpush1.msra.mxu0 0.0
    %195 = vmatprep.subr.mxu0 0.0
    %196 = vmatpush1.msra.mxu0 0.0
    %197 = vmatprep.subr.mxu0 0.0
    %198 = vmatpush1.msra.mxu0 0.0
    %199 = vmatprep.subr.mxu0 0.0
    %200 = vmatpush1.msra.mxu0 0.0
    %201 = vmatprep.subr.mxu0 0.0
    %202 = vmatpush1.msra.mxu0 0.0
    %203 = vmatprep.subr.mxu0 0.0
    %204 = vmatpush1.msra.mxu0 0.0
    %205 = vmatprep.subr.mxu0 0.0
    %206 = vmatpush1.msra.mxu0 0.0
    %207 = vmatprep.mubr.f32.mxu0 0.0
    %208 = vmatmul.mubr.f32.gmra.mrb[0].mxu0 %v141
    %v209 = vpop.f32.mrb[0].mxu0
    %v210 = vadd.f32 %v137, %v209
    %v211 = vpop.f32.mrb[0].mxu0
    %212 = vdwg.mxu0
    %v213 = vtanh.pop %v210
    %v214 = vmul.f32 %v213, 3.0
    %vm215 = vcmask 7168
    %v216 = vsel %vm215, %v214, 0.0
    %217 = vadd.xlane.f32.xlu0 %v216
    %v218 = vpop.xlane.xlu0 %217
    %v219 = vrot.slane %v218, 4
    %v220 = vadd.f32 %v218, %v219
    %v221 = vrot.slane %v220, 2
    %v222 = vadd.f32 %v220, %v221
    %v223 = vrot.slane %v222, 1
    %v224 = vadd.f32 %v222, %v223
    %s225 = vtos %v224
    %v226 = vrcp.pop 8.0
    %s227 = vtos %v226
    %s228 = smul.f32 %s225, %s227
    %v229 = vstv %s228
    %v230 = vsub.f32 %v214, %v229
    %v231 = vmul.f32 %v230, %v230
    %v232 = vsel %vm215, %v231, 0.0
    %233 = vadd.xlane.f32.xlu0 %v232
    %v234 = vpop.xlane.xlu0 %233
    %v235 = vrot.slane %v234, 4
    %v236 = vadd.f32 %v234, %v235
    %v237 = vrot.slane %v236, 2
    %v238 = vadd.f32 %v236, %v237
    %v239 = vrot.slane %v238, 1
    %v240 = vadd.f32 %v238, %v239
    %s241 = vtos %v240
    %v242 = vrcp.pop 8.0
    %s243 = vtos %v242
    %s244 = smul.f32 %s241, %s243
    %v245 = vstv %s244
    %v246 = vrsqrt.pop %v245
    %s247 = vtos %v246
    %v248 = vstv %s247
    %v249 = vmul.f32 %v230, %v248
    %250 = vst.msk [vmem:[%s10] sm:$0xff] %vm215, %v249
    %v251 = vld [vmem:[%s1] sm:$0xff]
    %v252 = vld [vmem:[%s1 + $0x8] sm:$0xff]
    %v253 = vld [vmem:[%s6] sm:$0xff]
    %v254 = vld [vmem:[%s6 + $0x8] sm:$0xff]
    %v255 = vld [vmem:[%s6 + $0x10] sm:$0xff]
    %v256 = vld [vmem:[%s6 + $0x18] sm:$0xff]
    %v257 = vld [vmem:[%s7] sm:$0xff]
    %v258 = vld [vmem:[%s7 + $0x8] sm:$0xff]
    %v259 = vld [vmem:[%s7 + $0x10] sm:$0xff]
    %v260 = vld [vmem:[%s7 + $0x18] sm:$0xff]
    %262 = vset.pattern.permute.xlu0 0
    %263 = vperm.xlu0 %262, %v257
    %v264 = vpop.permute.xlu0 %263
    %267 = vset.pattern.permute.xlu0 0
    %268 = vperm.xlu0 %267, %v258
    %v269 = vpop.permute.xlu0 %268
    %272 = vset.pattern.permute.xlu0 0
    %273 = vperm.xlu0 %272, %v259
    %v274 = vpop.permute.xlu0 %273
    %277 = vset.pattern.permute.xlu0 0
    %278 = vperm.xlu0 %277, %v260
    %v279 = vpop.permute.xlu0 %278
    %v282 = vsel %vm50, %v253, 0
    %v285 = vsel %vm50, %v254, 0
    %v288 = vsel %vm50, %v255, 0
    %v291 = vsel %vm50, %v256, 0
    %293 = vmatprep.subr.mxu0 0.0
    %294 = vmatpush1.msra.mxu0 %v251
    %295 = vmatprep.subr.mxu0 0.0
    %296 = vmatpush1.msra.mxu0 %v252
    %297 = vmatprep.subr.mxu0 0.0
    %298 = vmatpush1.msra.mxu0 0.0
    %299 = vmatprep.subr.mxu0 0.0
    %300 = vmatpush1.msra.mxu0 0.0
    %301 = vmatprep.subr.mxu0 0.0
    %302 = vmatpush1.msra.mxu0 0.0
    %303 = vmatprep.subr.mxu0 0.0
    %304 = vmatpush1.msra.mxu0 0.0
    %305 = vmatprep.subr.mxu0 0.0
    %306 = vmatpush1.msra.mxu0 0.0
    %307 = vmatprep.subr.mxu0 0.0
    %308 = vmatpush1.msra.mxu0 0.0
    %309 = vmatprep.subr.mxu0 0.0
    %310 = vmatpush1.msra.mxu0 0.0
    %311 = vmatprep.subr.mxu0 0.0
    %312 = vmatpush1.msra.mxu0 0.0
    %313 = vmatprep.subr.mxu0 0.0
    %314 = vmatpush1.msra.mxu0 0.0
    %315 = vmatprep.subr.mxu0 0.0
    %316 = vmatpush1.msra.mxu0 0.0
    %317 = vmatprep.subr.mxu0 0.0
    %318 = vmatpush1.msra.mxu0 0.0
    %319 = vmatprep.subr.mxu0 0.0
    %320 = vmatpush1.msra.mxu0 0.0
    %321 = vmatprep.subr.mxu0 0.0
    %322 = vmatpush1.msra.mxu0 0.0
    %323 = vmatprep.subr.mxu0 0.0
    %324 = vmatpush1.msra.mxu0 0.0
    %325 = vmatprep.subr.mxu0 0.0
    %326 = vmatpush1.msra.mxu0 0.0
    %327 = vmatprep.subr.mxu0 0.0
    %328 = vmatpush1.msra.mxu0 0.0
    %329 = vmatprep.subr.mxu0 0.0
    %330 = vmatpush1.msra.mxu0 0.0
    %331 = vmatprep.subr.mxu0 0.0
    %332 = vmatpush1.msra.mxu0 0.0
    %333 = vmatprep.subr.mxu0 0.0
    %334 = vmatpush1.msra.mxu0 0.0
    %335 = vmatprep.subr.mxu0 0.0
    %336 = vmatpush1.msra.mxu0 0.0
    %337 = vmatprep.subr.mxu0 0.0
    %338 = vmatpush1.msra.mxu0 0.0
    %339 = vmatprep.subr.mxu0 0.0
    %340 = vmatpush1.msra.mxu0 0.0
    %341 = vmatprep.subr.mxu0 0.0
    %342 = vmatpush1.msra.mxu0 0.0
    %343 = vmatprep.subr.mxu0 0.0
    %344 = vmatpush1.msra.mxu0 0.0
    %345 = vmatprep.subr.mxu0 0.0
    %346 = vmatpush1.msra.mxu0 0.0
    %347 = vmatprep.subr.mxu0 0.0
    %348 = vmatpush1.msra.mxu0 0.0
    %349 = vmatprep.subr.mxu0 0.0
    %350 = vmatpush1.msra.mxu0 0.0
    %351 = vmatprep.subr.mxu0 0.0
    %352 = vmatpush1.msra.mxu0 0.0
    %353 = vmatprep.subr.mxu0 0.0
    %354 = vmatpush1.msra.mxu0 0.0
    %355 = vmatprep.subr.mxu0 0.0
    %356 = vmatpush1.msra.mxu0 0.0
    %357 = vmatprep.mubr.f32.mxu0 0.0
    %358 = vmatmul.mubr.f32.gmra.mrb[0].mxu0 %v282
    %v359 = vpop.f32.mrb[0].mxu0
    %v360 = vadd.f32 %v264, %v359
    %v361 = vpop.f32.mrb[0].mxu0
    %362 = vmatprep.mubr.f32.mxu0 0.0
    %363 = vmatmul.mubr.f32.gmra.mrb[0].mxu0 %v285
    %v364 = vpop.f32.mrb[0].mxu0
    %v365 = vadd.f32 %v269, %v364
    %v366 = vpop.f32.mrb[0].mxu0
    %367 = vmatprep.mubr.f32.mxu0 0.0
    %368 = vmatmul.mubr.f32.gmra.mrb[0].mxu0 %v288
    %v369 = vpop.f32.mrb[0].mxu0
    %v370 = vadd.f32 %v274, %v369
    %v371 = vpop.f32.mrb[0].mxu0
    %372 = vmatprep.mubr.f32.mxu0 0.0
    %373 = vmatmul.mubr.f32.gmra.mrb[0].mxu0 %v291
    %v374 = vpop.f32.mrb[0].mxu0
    %v375 = vadd.f32 %v279, %v374
    %v376 = vpop.f32.mrb[0].mxu0
    %377 = vdwg.mxu0
    %v378 = vmul.f32 %v360, 0.5
    %v379 = vmul.f32 %v365, 0.5
    %v380 = vmul.f32 %v370, 0.5
    %v381 = vmul.f32 %v375, 0.5
    %v382 = vtanh.pop %v378
    %v383 = vtanh.pop %v379
    %v384 = vtanh.pop %v380
    %v385 = vtanh.pop %v381
    %v386 = vadd.f32 %v382, 1.0
    %v387 = vadd.f32 %v383, 1.0
    %v388 = vadd.f32 %v384, 1.0
    %v389 = vadd.f32 %v385, 1.0
    %v390 = vmul.f32 %v386, 0.5
    %v391 = vmul.f32 %v387, 0.5
    %v392 = vmul.f32 %v388, 0.5
    %v393 = vmul.f32 %v389, 0.5
    %v394 = vld [vmem:[%s8] sm:$0x3]
    %v395 = vld [vmem:[%s9] sm:$0x3]
    %397 = vset.pattern.permute.xlu0 0
    %398 = vperm.xlu0 %397, %v395
    %v399 = vpop.permute.xlu0 %398
    %v402 = vsel %vm139, %v394, 0
    %404 = vmatprep.subr.mxu0 0.0
    %405 = vmatpush1.msra.mxu0 %v390
    %406 = vmatprep.subr.mxu0 0.0
    %407 = vmatpush1.msra.mxu0 %v391
    %408 = vmatprep.subr.mxu0 0.0
    %409 = vmatpush1.msra.mxu0 %v392
    %410 = vmatprep.subr.mxu0 0.0
    %411 = vmatpush1.msra.mxu0 %v393
    %412 = vmatprep.subr.mxu0 0.0
    %413 = vmatpush1.msra.mxu0 0.0
    %414 = vmatprep.subr.mxu0 0.0
    %415 = vmatpush1.msra.mxu0 0.0
    %416 = vmatprep.subr.mxu0 0.0
    %417 = vmatpush1.msra.mxu0 0.0
    %418 = vmatprep.subr.mxu0 0.0
    %419 = vmatpush1.msra.mxu0 0.0
    %420 = vmatprep.subr.mxu0 0.0
    %421 = vmatpush1.msra.mxu0 0.0
    %422 = vmatprep.subr.mxu0 0.0
    %423 = vmatpush1.msra.mxu0 0.0
    %424 = vmatprep.subr.mxu0 0.0
    %425 = vmatpush1.msra.mxu0 0.0
    %426 = vmatprep.subr.mxu0 0.0
    %427 = vmatpush1.msra.mxu0 0.0
    %428 = vmatprep.subr.mxu0 0.0
    %429 = vmatpush1.msra.mxu0 0.0
    %430 = vmatprep.subr.mxu0 0.0
    %431 = vmatpush1.msra.mxu0 0.0
    %432 = vmatprep.subr.mxu0 0.0
    %433 = vmatpush1.msra.mxu0 0.0
    %434 = vmatprep.subr.mxu0 0.0
    %435 = vmatpush1.msra.mxu0 0.0
    %436 = vmatprep.subr.mxu0 0.0
    %437 = vmatpush1.msra.mxu0 0.0
    %438 = vmatprep.subr.mxu0 0.0
    %439 = vmatpush1.msra.mxu0 0.0
    %440 = vmatprep.subr.mxu0 0.0
    %441 = vmatpush1.msra.mxu0 0.0
    %442 = vmatprep.subr.mxu0 0.0
    %443 = vmatpush1.msra.mxu0 0.0
    %444 = vmatprep.subr.mxu0 0.0
    %445 = vmatpush1.msra.mxu0 0.0
    %446 = vmatprep.subr.mxu0 0.0
    %447 = vmatpush1.msra.mxu0 0.0
    %448 = vmatprep.subr.mxu0 0.0
    %449 = vmatpush1.msra.mxu0 0.0
    %450 = vmatprep.subr.mxu0 0.0
    %451 = vmatpush1.msra.mxu0 0.0
    %452 = vmatprep.subr.mxu0 0.0
    %453 = vmatpush1.msra.mxu0 0.0
    %454 = vmatprep.subr.mxu0 0.0
    %455 = vmatpush1.msra.mxu0 0.0
    %456 = vmatprep.subr.mxu0 0.0
    %457 = vmatpush1.msra.mxu0 0.0
    %458 = vmatprep.subr.mxu0 0.0
    %459 = vmatpush1.msra.mxu0 0.0
    %460 = vmatprep.subr.mxu0 0.0
    %461 = vmatpush1.msra.mxu0 0.0
    %462 = vmatprep.subr.mxu0 0.0
    %463 = vmatpush1.msra.mxu0 0.0
    %464 = vmatprep.subr.mxu0 0.0
    %465 = vmatpush1.msra.mxu0 0.0
    %466 = vmatprep.subr.mxu0 0.0
    %467 = vmatpush1.msra.mxu0 0.0
    %468 = vmatprep.mubr.f32.mxu0 0.0
    %469 = vmatmul.mubr.f32.gmra.mrb[0].mxu0 %v402
    %v470 = vpop.f32.mrb[0].mxu0
    %v471 = vadd.f32 %v399, %v470
    %v472 = vpop.f32.mrb[0].mxu0
    %473 = vdwg.mxu0
    %v474 = vlaneseq
    %v475 = vshrl.u32 %v474, 7
    %v476 = vmul.f32 %v471, 0.5
    %v477 = vtanh.pop %v476
    %v478 = vadd.f32 %v477, 1.0
    %v479 = vmul.f32 %v478, 0.5
    %v480 = vmul.f32 %v479, 3.0
    %v481 = vtanh.pop %v471
    %v482 = vmul.f32 %v481, 3.0
    %vm483 = vcmp.eq.s32.totalorder %v475, 0
    %v484 = vsel %vm483, %v480, %v482
    %vm485 = vcmask 58368
    %486 = vst.msk [vmem:[#allocation3] sm:$0x3] %vm485, %v484
    // Predicated region
    $region42: #{tpu_custom_call.1} parent=1 // pred_check
      _
    $region43: #{tpu_custom_call.1} parent=1 // pred_check_branch
      %488 = sbr.rel (0) target = $region45
    $region44: #{tpu_custom_call.1} parent=1 // pred_region
      _
    $region45: #{tpu_custom_call.1} parent=1 // pred_fallthru
      _
    // Predicated region
    $region46: #{tpu_custom_call.1} parent=1 // pred_check
      _
    $region47: #{tpu_custom_call.1} parent=1 // pred_check_branch
      %490 = sbr.rel (0) target = $region49
    $region48: #{tpu_custom_call.1} parent=1 // pred_region
      %s492 = ssub.s32 32, 32
      %493 = vsyncadd [#allocation4], %s492
      %s495 = sshll.u32 [#allocation3], 4
      %s496 = int_to_ptr.vmem [resolvable:$true] %s495
      %498 = dma.vmem_to_hbm [thread:$0]  %s496, 32, %s11, [#allocation4]
    $region49: #{tpu_custom_call.1} parent=1 // pred_fallthru
      _
    // Predicated region
    $region50: #{tpu_custom_call.1} parent=1 // pred_check
      _
    $region51: #{tpu_custom_call.1} parent=1 // pred_check_branch
      %500 = sbr.rel (0) target = $region53
    $region52: #{tpu_custom_call.1} parent=1 // pred_region
      _
    $region53: #{tpu_custom_call.1} parent=1 // pred_fallthru
      _
    // Predicated region
    $region54: #{tpu_custom_call.1} parent=1 // pred_check
      _
    $region55: #{tpu_custom_call.1} parent=1 // pred_check_branch
      %502 = sbr.rel (0) target = $region57
    $region56: #{tpu_custom_call.1} parent=1 // pred_region
      %503 = dma.done [#allocation4], 32
    $region57: #{tpu_custom_call.1} parent=1 // pred_fallthru
      _
    %504 = vsyncpa [#allocation4], 1

</llo_original>
